<compile_context>
chip_gen: v5e
topology: v5e:2x2
jax: 0.10.0
libtpu: 0.0.40
codegen_flags: <defaults>
</compile_context>

<pallas_src>
import functools
import math

import jax
import jax.numpy as jnp
from jax import lax
from jax.experimental import pallas as pl
from jax.experimental.pallas import tpu as pltpu


_SQRT1_2 = 1.0 / math.sqrt(2.0)


def _cnn2trans_kernel(p_ref, w_ref, b_ref, g_ref, be_ref, red_ref, bc_ref,
                      xt_ref, o_ref, *, approximate_gelu):
    # p_ref  : (1, TNG, CK)   pooled input, G patch rows packed per row (CK = G*C_in)
    # w_ref  : (CK, CL)       kron(I_G, W^T)                            (CL = G*C_out)
    # b_ref  : (1, CL)        conv bias, tiled G times
    # g_ref  : (1, CL)        LayerNorm gamma, tiled G times
    # be_ref : (1, CL)        LayerNorm beta,  tiled G times
    # red_ref: (CL, Gp)       per-group mean reduce matrix (columns G..Gp-1 are zero)
    # bc_ref : (Gp, CL)       per-group broadcast-back matrix (rows G..Gp-1 are zero)
    # xt_ref : (1, TNG, CL)   residual (flat, lane dense)
    # o_ref  : (1, TNG, CL)
    p = p_ref[0]                                                        # (TNG, CK)

    # 1x1 conv on the MXU, bias added with one VPU broadcast add.
    y = jnp.dot(p, w_ref[...], preferred_element_type=jnp.float32)     # (TNG, CL)
    y = y + b_ref[...]

    # Segmented LayerNorm over each C_out group (eps=1e-6). Rank-G factored reduce:
    # (TNG,CL)@(CL,Gp) -> per-group mean, (TNG,Gp)@(Gp,CL) -> broadcast back. All MXU.
    mean_g = jnp.dot(y, red_ref[...], preferred_element_type=jnp.float32)     # (TNG, Gp)
    mean = jnp.dot(mean_g, bc_ref[...], preferred_element_type=jnp.float32)   # (TNG, CL)
    cen = y - mean
    var_g = jnp.dot(cen * cen, red_ref[...], preferred_element_type=jnp.float32)
    var = jnp.dot(var_g, bc_ref[...], preferred_element_type=jnp.float32)
    y = cen * lax.rsqrt(var + 1e-6)
    y = y * g_ref[...] + be_ref[...]

    # GELU: exact erf by default (matches nn.GELU()); tanh form is an opt-in EUP path.
    if approximate_gelu:
        y = 0.5 * y * (1.0 + jnp.tanh(0.7978845608028654 * (y + 0.044715 * y * y * y)))
    else:
        y = 0.5 * y * (1.0 + lax.erf(y * _SQRT1_2))

    o_ref[0] = xt_ref[0] + y


def _group_factor(c_out):
    """Smallest G with G*c_out a multiple of 128 (lane-dense output rows)."""
    return 1 if c_out % 128 == 0 else 128 // math.gcd(c_out, 128)


def prepare_cnn2trans_params(weight, bias, gamma, beta):
    """Per-model constant preprocessing (can be hoisted out of the per-call path)."""
    f32 = jnp.float32
    C_out, C_in = weight.shape
    G = _group_factor(C_out)
    Gp = max(8, ((G + 7) // 8) * 8)
    CK, CL = G * C_in, G * C_out

    eye_g = jnp.eye(G, dtype=f32)
    w_blk = jnp.kron(eye_g, jnp.asarray(weight, f32).T)                      # (CK, CL)
    b_row = jnp.tile(jnp.asarray(bias, f32), G).reshape(1, CL)
    g_row = jnp.tile(jnp.asarray(gamma, f32), G).reshape(1, CL)
    be_row = jnp.tile(jnp.asarray(beta, f32), G).reshape(1, CL)

    red = jnp.kron(eye_g, jnp.full((C_out, 1), 1.0 / C_out, f32))            # (CL, G)
    red = jnp.pad(red, ((0, 0), (0, Gp - G)))                                # (CL, Gp)
    bcast = jnp.kron(eye_g, jnp.ones((1, C_out), f32))                       # (G, CL)
    bcast = jnp.pad(bcast, ((0, Gp - G), (0, 0)))                            # (Gp, CL)

    return dict(G=G, Gp=Gp, CK=CK, CL=CL, C_in=C_in, C_out=C_out,
                w_blk=w_blk, b_row=b_row, g_row=g_row, be_row=be_row,
                red=red, bcast=bcast)


def _pick_tng(NG, CK, CL, B, tng_max):
    """Size the N-tile from a streamed-bytes budget (~3 MiB/step; 2x when double-buffered),
    keeping total well under the v5e 16 MiB scoped-VMEM default (and v7x's smaller VMEM)."""
    row_bytes = 4 * (CK + 2 * CL)            # p + xt + out per packed row, f32
    budget = 3 << 20
    t = max(8, min(int(tng_max), budget // row_bytes))
    t = (t // 8) * 8                          # (8,128) rule for non-full blocks
    if NG <= t:
        t = NG                                # full-extent block is always legal
        if B == 1 and NG >= 16:
            # v7x has 2 TensorCores per chip: keep >= 2 parallel grid points.
            t = max(8, ((NG // 2) // 8) * 8)
    return t


def cnn2trans(x, x_tran, weight, bias, gamma, beta, dw_stride, *,
              tng_max=4096, approximate_gelu=False):
    """x: [B, C_in, H, W] (NCHW); x_tran: [B, N, C_out]; weight: [C_out, C_in].

    Returns [B, N, C_out], matching the PyTorch CNN2Trans forward.
    """
    B, C_in, H, W = x.shape
    s = dw_stride
    Hp, Wp = H // s, W // s
    N = Hp * Wp
    C_out = weight.shape[0]
    assert x_tran.shape == (B, N, C_out)

    f32 = jnp.float32
    prm = prepare_cnn2trans_params(weight, bias, gamma, beta)
    G, Gp, CK, CL = prm["G"], prm["Gp"], prm["CK"], prm["CL"]

    # Avg-pool in XLA (linear -> commutes with the 1x1 conv): kernel input is N*C_in.
    pooled = x.astype(f32).reshape(B, C_in, Hp, s, Wp, s).mean(axis=(3, 5))   # (B,C_in,Hp,Wp)
    pooled = pooled.reshape(B, C_in, N).transpose(0, 2, 1)                    # (B,N,C_in)

    # Keep the lane-dense grouping even when N % G != 0: pad N with zero rows, slice later.
    Npad = ((N + G - 1) // G) * G
    xt = jnp.asarray(x_tran, f32)
    if Npad != N:
        pad = Npad - N
        pooled = jnp.pad(pooled, ((0, 0), (0, pad), (0, 0)))
        xt = jnp.pad(xt, ((0, 0), (0, pad), (0, 0)))
    NG = Npad // G

    pooled_g = pooled.reshape(B, NG, CK)       # contiguous G-row packing
    xt_flat = xt.reshape(B, NG, CL)            # contiguous, lane dense

    TNG = _pick_tng(NG, CK, CL, B, tng_max)
    grid = (B, pl.cdiv(NG, TNG))

    cost = pl.CostEstimate(
        flops=int(2 * B * NG * CK * CL          # main matmul
                  + 8 * B * NG * CL * Gp        # factored LN reduce/broadcast matmuls
                  + 12 * B * NG * CL),          # elementwise tail
        transcendentals=int(2 * B * NG * CL),   # erf (or tanh) + rsqrt
        bytes_accessed=int(4 * (B * NG * (CK + 2 * CL)
                                + CK * CL + 3 * CL + 2 * CL * Gp)),
    )

    kernel = functools.partial(_cnn2trans_kernel, approximate_gelu=approximate_gelu)

    out_flat = pl.pallas_call(
        kernel,
        out_shape=jax.ShapeDtypeStruct((B, NG, CL), f32),
        grid_spec=pltpu.PrefetchScalarGridSpec(
            num_scalar_prefetch=0,
            grid=grid,
            in_specs=[
                pl.BlockSpec((1, TNG, CK), lambda b, j: (b, j, 0)),   # pooled (streamed)
                pl.BlockSpec((CK, CL), lambda b, j: (0, 0)),          # kron weight
                pl.BlockSpec((1, CL), lambda b, j: (0, 0)),           # bias
                pl.BlockSpec((1, CL), lambda b, j: (0, 0)),           # gamma
                pl.BlockSpec((1, CL), lambda b, j: (0, 0)),           # beta
                pl.BlockSpec((CL, Gp), lambda b, j: (0, 0)),          # LN reduce matrix
                pl.BlockSpec((Gp, CL), lambda b, j: (0, 0)),          # LN broadcast matrix
                pl.BlockSpec((1, TNG, CL), lambda b, j: (b, j, 0)),   # residual (streamed)
            ],
            out_specs=pl.BlockSpec((1, TNG, CL), lambda b, j: (b, j, 0)),
        ),
        # Saves a copy only when x_tran's buffer is donated (inside jit); harmless otherwise.
        input_output_aliases={7: 0},
        compiler_params=pltpu.CompilerParams(
            dimension_semantics=("parallel", "parallel")),
        cost_estimate=cost,
    )(pooled_g, prm["w_blk"], prm["b_row"], prm["g_row"], prm["be_row"],
      prm["red"], prm["bcast"], xt_flat)

    out = out_flat.reshape(B, Npad, C_out)
    if Npad != N:
        out = out[:, :N]
    return out


def _reference(x, x_tran, weight, bias, gamma, beta, dw_stride):
    """Pure-JAX reference mirroring the PyTorch forward, for sanity checking."""
    B, C_in, H, W = x.shape
    s = dw_stride
    C_out = weight.shape[0]
    # 1x1 conv
    y = jnp.einsum('bchw,oc->bohw', x, weight) + bias[None, :, None, None]
    # avg pool
    y = y.reshape(B, C_out, H // s, s, W // s, s).mean(axis=(3, 5))
    # flatten(2).transpose(1,2)
    y = y.reshape(B, C_out, -1).transpose(0, 2, 1)
    # layernorm (eps=1e-6)
    mean = y.mean(-1, keepdims=True)
    var = ((y - mean) ** 2).mean(-1, keepdims=True)
    y = (y - mean) / jnp.sqrt(var + 1e-6) * gamma + beta
    # exact GELU
    y = 0.5 * y * (1.0 + lax.erf(y / math.sqrt(2.0)))
    return x_tran + y


if __name__ == "__main__":
    key = jax.random.PRNGKey(0)
    k1, k2, k3, k4 = jax.random.split(key, 4)

    B, C_in, H, W = 2, 4, 16, 16
    dw_stride = 4
    C_out = 32
    N = (H // dw_stride) * (W // dw_stride)

    x = jax.random.normal(k1, (B, C_in, H, W), jnp.float32)
    x_tran = jax.random.normal(k2, (B, N, C_out), jnp.float32)

    # deterministic parameters (Conv2d 1x1 weight [C_out, C_in], bias [C_out];
    # LayerNorm gamma=1, beta=0 as in PyTorch defaults)
    weight = 0.1 * jax.random.normal(k3, (C_out, C_in), jnp.float32)
    bias = 0.05 * jax.random.normal(k4, (C_out,), jnp.float32)
    gamma = jnp.ones((C_out,), jnp.float32)
    beta = jnp.zeros((C_out,), jnp.float32)

    # Reference first (keeps the check independent of the aliased output buffer).
    ref = _reference(x, x_tran, weight, bias, gamma, beta, dw_stride)

    out = cnn2trans(x, x_tran, weight, bias, gamma, beta, dw_stride)
    out = jax.block_until_ready(out)

    assert out.shape == (B, N, C_out)
    assert jnp.allclose(out, ref, atol=2e-4, rtol=2e-4), "mismatch vs reference"

    print("KERNEL_OK")
</pallas_src>

<mosaic_0001>
module attributes {stable_mosaic.version = 11 : i64} {
  func.func @_cnn2trans_kernel(%arg0: i32, %arg1: i32, %arg2: memref<1x4x16xf32, #tpu.memory_space<vmem>>, %arg3: memref<16x128xf32, #tpu.memory_space<vmem>>, %arg4: memref<1x128xf32, #tpu.memory_space<vmem>>, %arg5: memref<1x128xf32, #tpu.memory_space<vmem>>, %arg6: memref<1x128xf32, #tpu.memory_space<vmem>>, %arg7: memref<128x8xf32, #tpu.memory_space<vmem>>, %arg8: memref<8x128xf32, #tpu.memory_space<vmem>>, %arg9: memref<1x4x128xf32, #tpu.memory_space<vmem>>, %arg10: memref<1x4x128xf32, #tpu.memory_space<vmem>>) attributes {dimension_semantics = [#tpu.dimension_semantics<parallel>, #tpu.dimension_semantics<parallel>], iteration_bounds = array<i64: 2, 1>, scalar_prefetch = 0 : i64, scratch_operands = 0 : i64, tpu.core_type = #tpu.core_type<tc>, window_params = [{transform_indices = @transform_0, window_bounds = array<i64: 1, 4, 16>}, {pipeline_mode = #tpu.pipeline_mode<synchronous>, transform_indices = @transform_1, window_bounds = array<i64: 16, 128>}, {pipeline_mode = #tpu.pipeline_mode<synchronous>, transform_indices = @transform_2, window_bounds = array<i64: 1, 128>}, {pipeline_mode = #tpu.pipeline_mode<synchronous>, transform_indices = @transform_3, window_bounds = array<i64: 1, 128>}, {pipeline_mode = #tpu.pipeline_mode<synchronous>, transform_indices = @transform_4, window_bounds = array<i64: 1, 128>}, {pipeline_mode = #tpu.pipeline_mode<synchronous>, transform_indices = @transform_5, window_bounds = array<i64: 128, 8>}, {pipeline_mode = #tpu.pipeline_mode<synchronous>, transform_indices = @transform_6, window_bounds = array<i64: 8, 128>}, {transform_indices = @transform_7, window_bounds = array<i64: 1, 4, 128>}, {transform_indices = @transform_8, window_bounds = array<i64: 1, 4, 128>}]} {
    %c0 = arith.constant 0 : index
    %c0_0 = arith.constant 0 : index
    %c0_1 = arith.constant 0 : index
    %0 = vector.load %arg2[%c0, %c0_0, %c0_1] : memref<1x4x16xf32, #tpu.memory_space<vmem>>, vector<1x4x16xf32>
    %1 = vector.shape_cast %0 : vector<1x4x16xf32> to vector<4x16xf32>
    %c0_2 = arith.constant 0 : index
    %c0_3 = arith.constant 0 : index
    %2 = vector.load %arg3[%c0_2, %c0_3] : memref<16x128xf32, #tpu.memory_space<vmem>>, vector<16x128xf32>
    %cst = arith.constant dense<0.000000e+00> : vector<4x128xf32>
    %3 = tpu.matmul %1, %2, %cst {dimension_numbers = #tpu.dot_dimension_numbers<[1], [0], [0], [1], [0, 0, 1, 1], [], []>} : vector<4x16xf32>, vector<16x128xf32>, vector<4x128xf32> -> vector<4x128xf32>
    %c0_4 = arith.constant 0 : index
    %c0_5 = arith.constant 0 : index
    %4 = vector.load %arg4[%c0_4, %c0_5] : memref<1x128xf32, #tpu.memory_space<vmem>>, vector<1x128xf32>
    %5 = vector.broadcast %4 : vector<1x128xf32> to vector<4x128xf32>
    %6 = arith.addf %3, %5 : vector<4x128xf32>
    %c0_6 = arith.constant 0 : index
    %c0_7 = arith.constant 0 : index
    %7 = vector.load %arg7[%c0_6, %c0_7] : memref<128x8xf32, #tpu.memory_space<vmem>>, vector<128x8xf32>
    %cst_8 = arith.constant dense<0.000000e+00> : vector<4x8xf32>
    %8 = tpu.matmul %6, %7, %cst_8 {dimension_numbers = #tpu.dot_dimension_numbers<[1], [0], [0], [1], [0, 0, 1, 1], [], []>} : vector<4x128xf32>, vector<128x8xf32>, vector<4x8xf32> -> vector<4x8xf32>
    %c0_9 = arith.constant 0 : index
    %c0_10 = arith.constant 0 : index
    %9 = vector.load %arg8[%c0_9, %c0_10] : memref<8x128xf32, #tpu.memory_space<vmem>>, vector<8x128xf32>
    %cst_11 = arith.constant dense<0.000000e+00> : vector<4x128xf32>
    %10 = tpu.matmul %8, %9, %cst_11 {dimension_numbers = #tpu.dot_dimension_numbers<[1], [0], [0], [1], [0, 0, 1, 1], [], []>} : vector<4x8xf32>, vector<8x128xf32>, vector<4x128xf32> -> vector<4x128xf32>
    %11 = arith.subf %6, %10 : vector<4x128xf32>
    %12 = arith.mulf %11, %11 : vector<4x128xf32>
    %c0_12 = arith.constant 0 : index
    %c0_13 = arith.constant 0 : index
    %13 = vector.load %arg7[%c0_12, %c0_13] : memref<128x8xf32, #tpu.memory_space<vmem>>, vector<128x8xf32>
    %cst_14 = arith.constant dense<0.000000e+00> : vector<4x8xf32>
    %14 = tpu.matmul %12, %13, %cst_14 {dimension_numbers = #tpu.dot_dimension_numbers<[1], [0], [0], [1], [0, 0, 1, 1], [], []>} : vector<4x128xf32>, vector<128x8xf32>, vector<4x8xf32> -> vector<4x8xf32>
    %c0_15 = arith.constant 0 : index
    %c0_16 = arith.constant 0 : index
    %15 = vector.load %arg8[%c0_15, %c0_16] : memref<8x128xf32, #tpu.memory_space<vmem>>, vector<8x128xf32>
    %cst_17 = arith.constant dense<0.000000e+00> : vector<4x128xf32>
    %16 = tpu.matmul %14, %15, %cst_17 {dimension_numbers = #tpu.dot_dimension_numbers<[1], [0], [0], [1], [0, 0, 1, 1], [], []>} : vector<4x8xf32>, vector<8x128xf32>, vector<4x128xf32> -> vector<4x128xf32>
    %cst_18 = arith.constant 9.99999997E-7 : f32
    %17 = vector.broadcast %cst_18 : f32 to vector<4x128xf32>
    %18 = arith.addf %16, %17 : vector<4x128xf32>
    %19 = math.rsqrt %18 : vector<4x128xf32>
    %20 = arith.mulf %11, %19 : vector<4x128xf32>
    %c0_19 = arith.constant 0 : index
    %c0_20 = arith.constant 0 : index
    %21 = vector.load %arg5[%c0_19, %c0_20] : memref<1x128xf32, #tpu.memory_space<vmem>>, vector<1x128xf32>
    %22 = vector.broadcast %21 : vector<1x128xf32> to vector<4x128xf32>
    %23 = arith.mulf %20, %22 : vector<4x128xf32>
    %c0_21 = arith.constant 0 : index
    %c0_22 = arith.constant 0 : index
    %24 = vector.load %arg6[%c0_21, %c0_22] : memref<1x128xf32, #tpu.memory_space<vmem>>, vector<1x128xf32>
    %25 = vector.broadcast %24 : vector<1x128xf32> to vector<4x128xf32>
    %26 = arith.addf %23, %25 : vector<4x128xf32>
    %cst_23 = arith.constant 5.000000e-01 : f32
    %27 = vector.broadcast %cst_23 : f32 to vector<4x128xf32>
    %28 = arith.mulf %27, %26 : vector<4x128xf32>
    %cst_24 = arith.constant 0.707106769 : f32
    %29 = vector.broadcast %cst_24 : f32 to vector<4x128xf32>
    %30 = arith.mulf %26, %29 : vector<4x128xf32>
    %31 = math.erf %30 : vector<4x128xf32>
    %cst_25 = arith.constant 1.000000e+00 : f32
    %32 = vector.broadcast %cst_25 : f32 to vector<4x128xf32>
    %33 = arith.addf %32, %31 : vector<4x128xf32>
    %34 = arith.mulf %28, %33 : vector<4x128xf32>
    %c0_26 = arith.constant 0 : index
    %c0_27 = arith.constant 0 : index
    %c0_28 = arith.constant 0 : index
    %35 = vector.load %arg9[%c0_26, %c0_27, %c0_28] : memref<1x4x128xf32, #tpu.memory_space<vmem>>, vector<1x4x128xf32>
    %36 = vector.shape_cast %35 : vector<1x4x128xf32> to vector<4x128xf32>
    %37 = arith.addf %36, %34 : vector<4x128xf32>
    %c0_29 = arith.constant 0 : index
    %c0_30 = arith.constant 0 : index
    %c0_31 = arith.constant 0 : index
    %38 = vector.load %arg10[%c0_29, %c0_30, %c0_31] : memref<1x4x128xf32, #tpu.memory_space<vmem>>, vector<1x4x128xf32>
    %39 = vector.shape_cast %38 : vector<1x4x128xf32> to vector<4x128xf32>
    %40 = vector.shape_cast %37 : vector<4x128xf32> to vector<1x4x128xf32>
    tpu.vector_store %arg10[%c0_29, %c0_30, %c0_31], %40 {strides = array<i32>} : memref<1x4x128xf32, #tpu.memory_space<vmem>>, vector<1x4x128xf32>,
    return
  }
  func.func @transform_0(%arg0: i32, %arg1: i32) -> (i32, i32, i32) {
    %c0_i32 = arith.constant 0 : i32
    %c0_i32_0 = arith.constant 0 : i32
    return %arg0, %arg1, %c0_i32 : i32, i32, i32
  }
  func.func @transform_1(%arg0: i32, %arg1: i32) -> (i32, i32) {
    %c0_i32 = arith.constant 0 : i32
    %c0_i32_0 = arith.constant 0 : i32
    %c0_i32_1 = arith.constant 0 : i32
    return %c0_i32, %c0_i32_0 : i32, i32
  }
  func.func @transform_2(%arg0: i32, %arg1: i32) -> (i32, i32) {
    %c0_i32 = arith.constant 0 : i32
    %c0_i32_0 = arith.constant 0 : i32
    %c0_i32_1 = arith.constant 0 : i32
    return %c0_i32, %c0_i32_0 : i32, i32
  }
  func.func @transform_3(%arg0: i32, %arg1: i32) -> (i32, i32) {
    %c0_i32 = arith.constant 0 : i32
    %c0_i32_0 = arith.constant 0 : i32
    %c0_i32_1 = arith.constant 0 : i32
    return %c0_i32, %c0_i32_0 : i32, i32
  }
  func.func @transform_4(%arg0: i32, %arg1: i32) -> (i32, i32) {
    %c0_i32 = arith.constant 0 : i32
    %c0_i32_0 = arith.constant 0 : i32
    %c0_i32_1 = arith.constant 0 : i32
    return %c0_i32, %c0_i32_0 : i32, i32
  }
  func.func @transform_5(%arg0: i32, %arg1: i32) -> (i32, i32) {
    %c0_i32 = arith.constant 0 : i32
    %c0_i32_0 = arith.constant 0 : i32
    %c0_i32_1 = arith.constant 0 : i32
    return %c0_i32, %c0_i32_0 : i32, i32
  }
  func.func @transform_6(%arg0: i32, %arg1: i32) -> (i32, i32) {
    %c0_i32 = arith.constant 0 : i32
    %c0_i32_0 = arith.constant 0 : i32
    %c0_i32_1 = arith.constant 0 : i32
    return %c0_i32, %c0_i32_0 : i32, i32
  }
  func.func @transform_7(%arg0: i32, %arg1: i32) -> (i32, i32, i32) {
    %c0_i32 = arith.constant 0 : i32
    %c0_i32_0 = arith.constant 0 : i32
    return %arg0, %arg1, %c0_i32 : i32, i32, i32
  }
  func.func @transform_8(%arg0: i32, %arg1: i32) -> (i32, i32, i32) {
    %c0_i32 = arith.constant 0 : i32
    %c0_i32_0 = arith.constant 0 : i32
    return %arg0, %arg1, %c0_i32 : i32, i32, i32
  }
}

</mosaic_0001>

<llo_original>
// kernel: tpu_custom_call.1
$region0: #{tpu_custom_call.1}
  #allocation0 [shape = 'u32[]', space=smem, size = 0x4, offset = 0x4, fixed_abs, tag = 'smem constant byte address 0x4 - core index']
  #allocation1 [shape = 'u32[72,128]{1,0:T(1,128)}', space=vmem, size = 0x9000, scoped, tag = 'internal scratch']
  %s0 = inlined_call_operand.vmem [shape: f32[2,4,16], index: 0, kind: input, shape index: {}]
  %s1 = inlined_call_operand.vmem [shape: f32[16,128], index: 1, kind: input, shape index: {}]
  %s2 = inlined_call_operand.vmem [shape: f32[1,128], index: 2, kind: input, shape index: {}]
  %s3 = inlined_call_operand.vmem [shape: f32[1,128], index: 3, kind: input, shape index: {}]
  %s4 = inlined_call_operand.vmem [shape: f32[1,128], index: 4, kind: input, shape index: {}]
  %s5 = inlined_call_operand.vmem [shape: f32[128,8], index: 5, kind: input, shape index: {}]
  %s6 = inlined_call_operand.vmem [shape: f32[8,128], index: 6, kind: input, shape index: {}]
  %s7 = inlined_call_operand.hbm [shape: f32[2,4,128], index: 7, kind: input, shape index: {}, may-alias: {7,8}]
  %s8 = inlined_call_operand.hbm [shape: f32[2,4,128], index: 8, kind: output, shape index: {}, may-alias: {7,8}]
  %s9 = sld [smem:[#allocation0]]
  $region69: #{tpu_custom_call.1} parent=0
    _
  %s11 = ssub.s32 1, %s9
  %s12 = scalar_select 0, %s11, %s9
  $region1: #{tpu_custom_call.1} parent=0
    #allocation2 [shape = 'u8[4096]{0}', space=vmem, size = 0x1000, scoped, tag = 'input window, operand 7']
    #allocation3 [shape = 's32[2]{0}', space=sflag, size = 0x8, scoped, tag = 'scoped memory for tpu_custom_call.1']
    #allocation4 [shape = 's32[2]{0}', space=sflag, size = 0x8, scoped, tag = 'scoped memory for tpu_custom_call.1']
    #allocation5 [shape = 'u8[4096]{0}', space=vmem, size = 0x1000, scoped, tag = 'output window, operand 0']
    %13 = vsyncpa [#allocation3], 0
    %s14 = scalar_lea.sflag [#allocation3], 1
    %15 = vsyncpa %s14, 0
    %16 = vsyncpa [#allocation4], 0
    %s17 = scalar_lea.sflag [#allocation4], 1
    %18 = vsyncpa %s17, 0
    loop: start=0, step=1, limit=4
    $region2: #{tpu_custom_call.1} parent=1 // loop_pre_header
      _
    $region3: #{tpu_custom_call.1} parent=1 // loop_header
      %s20 = sphi 0, %s24
      %p21 = scmp.ge.s32.totalorder %s20, 4
      %s27 = sphi 0, %s39
      %s28 = sphi 0, %s35
      %s29 = sphi 0, %s27
      %s30 = sphi 0, %s28
      %s31 = sphi 0, %s29
      %s32 = sphi 0, %s30
      %s44 = sphi 0, %s46
      %s47 = sphi 0, %s44
      %s48 = sphi 0, %s47
      %s64 = sphi 0, %s48
      %s68 = sphi 0, %s68
      %s70 = sphi 0, %s68
      %s71 = sphi 0, %s70
      %s85 = sphi 0, %s71
      %s89 = sphi 0, %s89
      %s91 = sphi 0, %s89
      %s92 = sphi 0, %s91
      %s106 = sphi 0, %s92
      %s110 = sphi 0, %s110
      %s112 = sphi 0, %s110
      %s113 = sphi 0, %s112
      %s127 = sphi 0, %s113
      %s131 = sphi 0, %s131
      %s133 = sphi 0, %s131
      %s134 = sphi 0, %s133
      %s148 = sphi 0, %s134
      %s152 = sphi 0, %s152
      %s154 = sphi 0, %s152
      %s155 = sphi 0, %s154
      %s169 = sphi 0, %s155
      %s173 = sphi 0, %s173
      %s175 = sphi 0, %s173
      %s176 = sphi 0, %s175
      %s190 = sphi 0, %s176
      %s198 = sphi 0, %s200
      %s201 = sphi 0, %s198
      %s202 = sphi 0, %s201
      %s218 = sphi 0, %s202
      %s226 = sphi 0, %s228
      %s229 = sphi 0, %s226
      %s230 = sphi 0, %s229
      %s246 = sphi 0, %s230
    $region4: #{tpu_custom_call.1} parent=1 // loop_header_branch
      %23 = sbr.rel (%p21) target = $region8
    $region5: #{tpu_custom_call.1} parent=1 // loop_body
      %s25 = ssub.s32 %s20, 1
      %s26 = ssub.s32 %s20, 2
      %s33 = sadd.s32 1, %s28
      %p34 = scmp.ge.s32.totalorder %s33, 1
      %s35 = scalar_select %p34, 0, %s33
      %s36 = sadd.s32 1, %s27
      %s37 = scalar_select %p34, %s36, %s27
      %p38 = scmp.ge.s32.totalorder %s37, 2
      %s39 = scalar_select %p38, 0, %s37
      %s40 = ssub.s32 %s27, %s39
      %s41 = ssub.s32 %s28, %s35
      %s42 = sor.u32 %s40, %s41
      %p43 = scmp.eq.s32.totalorder %s42, 0
      %s45 = sadd.s32 %s44, 1
      %s46 = scalar_select %p43, %s44, %s45
      %p49 = pneg %p43
      %p50 = scmp.eq.s32.totalorder %s20, 1
      %p51 = por %p49, %p50
      %p52 = scmp.ne.s32.totalorder %s44, %s47
      %p53 = scmp.eq.s32.totalorder %s20, 0
      %p54 = por %p52, %p53
      %p55 = scmp.ne.s32.totalorder %s44, %s47
      %p56 = scmp.eq.s32.totalorder %s25, 1
      %p57 = por %p55, %p56
      %p58 = scmp.ne.s32.totalorder %s47, %s48
      %p59 = scmp.eq.s32.totalorder %s25, 0
      %p60 = por %p58, %p59
      %p61 = scmp.ne.s32.totalorder %s47, %s48
      %p62 = scmp.eq.s32.totalorder %s26, 1
      %p63 = por %p61, %p62
      %p65 = scmp.ne.s32.totalorder %s48, %s64
      %p66 = scmp.eq.s32.totalorder %s26, 0
      %p67 = por %p65, %p66
      %s69 = sadd.s32 %s68, 1
      %p72 = scmp.eq.s32.totalorder %s20, 1
      %p73 = scmp.ne.s32.totalorder %s68, %s70
      %p74 = scmp.eq.s32.totalorder %s20, 0
      %p75 = por %p73, %p74
      %p76 = scmp.ne.s32.totalorder %s68, %s70
      %p77 = scmp.eq.s32.totalorder %s25, 1
      %p78 = por %p76, %p77
      %p79 = scmp.ne.s32.totalorder %s70, %s71
      %p80 = scmp.eq.s32.totalorder %s25, 0
      %p81 = por %p79, %p80
      %p82 = scmp.ne.s32.totalorder %s70, %s71
      %p83 = scmp.eq.s32.totalorder %s26, 1
      %p84 = por %p82, %p83
      %p86 = scmp.ne.s32.totalorder %s71, %s85
      %p87 = scmp.eq.s32.totalorder %s26, 0
      %p88 = por %p86, %p87
      %s90 = sadd.s32 %s89, 1
      %p93 = scmp.eq.s32.totalorder %s20, 1
      %p94 = scmp.ne.s32.totalorder %s89, %s91
      %p95 = scmp.eq.s32.totalorder %s20, 0
      %p96 = por %p94, %p95
      %p97 = scmp.ne.s32.totalorder %s89, %s91
      %p98 = scmp.eq.s32.totalorder %s25, 1
      %p99 = por %p97, %p98
      %p100 = scmp.ne.s32.totalorder %s91, %s92
      %p101 = scmp.eq.s32.totalorder %s25, 0
      %p102 = por %p100, %p101
      %p103 = scmp.ne.s32.totalorder %s91, %s92
      %p104 = scmp.eq.s32.totalorder %s26, 1
      %p105 = por %p103, %p104
      %p107 = scmp.ne.s32.totalorder %s92, %s106
      %p108 = scmp.eq.s32.totalorder %s26, 0
      %p109 = por %p107, %p108
      %s111 = sadd.s32 %s110, 1
      %p114 = scmp.eq.s32.totalorder %s20, 1
      %p115 = scmp.ne.s32.totalorder %s110, %s112
      %p116 = scmp.eq.s32.totalorder %s20, 0
      %p117 = por %p115, %p116
      %p118 = scmp.ne.s32.totalorder %s110, %s112
      %p119 = scmp.eq.s32.totalorder %s25, 1
      %p120 = por %p118, %p119
      %p121 = scmp.ne.s32.totalorder %s112, %s113
      %p122 = scmp.eq.s32.totalorder %s25, 0
      %p123 = por %p121, %p122
      %p124 = scmp.ne.s32.totalorder %s112, %s113
      %p125 = scmp.eq.s32.totalorder %s26, 1
      %p126 = por %p124, %p125
      %p128 = scmp.ne.s32.totalorder %s113, %s127
      %p129 = scmp.eq.s32.totalorder %s26, 0
      %p130 = por %p128, %p129
      %s132 = sadd.s32 %s131, 1
      %p135 = scmp.eq.s32.totalorder %s20, 1
      %p136 = scmp.ne.s32.totalorder %s131, %s133
      %p137 = scmp.eq.s32.totalorder %s20, 0
      %p138 = por %p136, %p137
      %p139 = scmp.ne.s32.totalorder %s131, %s133
      %p140 = scmp.eq.s32.totalorder %s25, 1
      %p141 = por %p139, %p140
      %p142 = scmp.ne.s32.totalorder %s133, %s134
      %p143 = scmp.eq.s32.totalorder %s25, 0
      %p144 = por %p142, %p143
      %p145 = scmp.ne.s32.totalorder %s133, %s134
      %p146 = scmp.eq.s32.totalorder %s26, 1
      %p147 = por %p145, %p146
      %p149 = scmp.ne.s32.totalorder %s134, %s148
      %p150 = scmp.eq.s32.totalorder %s26, 0
      %p151 = por %p149, %p150
      %s153 = sadd.s32 %s152, 1
      %p156 = scmp.eq.s32.totalorder %s20, 1
      %p157 = scmp.ne.s32.totalorder %s152, %s154
      %p158 = scmp.eq.s32.totalorder %s20, 0
      %p159 = por %p157, %p158
      %p160 = scmp.ne.s32.totalorder %s152, %s154
      %p161 = scmp.eq.s32.totalorder %s25, 1
      %p162 = por %p160, %p161
      %p163 = scmp.ne.s32.totalorder %s154, %s155
      %p164 = scmp.eq.s32.totalorder %s25, 0
      %p165 = por %p163, %p164
      %p166 = scmp.ne.s32.totalorder %s154, %s155
      %p167 = scmp.eq.s32.totalorder %s26, 1
      %p168 = por %p166, %p167
      %p170 = scmp.ne.s32.totalorder %s155, %s169
      %p171 = scmp.eq.s32.totalorder %s26, 0
      %p172 = por %p170, %p171
      %s174 = sadd.s32 %s173, 1
      %p177 = scmp.eq.s32.totalorder %s20, 1
      %p178 = scmp.ne.s32.totalorder %s173, %s175
      %p179 = scmp.eq.s32.totalorder %s20, 0
      %p180 = por %p178, %p179
      %p181 = scmp.ne.s32.totalorder %s173, %s175
      %p182 = scmp.eq.s32.totalorder %s25, 1
      %p183 = por %p181, %p182
      %p184 = scmp.ne.s32.totalorder %s175, %s176
      %p185 = scmp.eq.s32.totalorder %s25, 0
      %p186 = por %p184, %p185
      %p187 = scmp.ne.s32.totalorder %s175, %s176
      %p188 = scmp.eq.s32.totalorder %s26, 1
      %p189 = por %p187, %p188
      %p191 = scmp.ne.s32.totalorder %s176, %s190
      %p192 = scmp.eq.s32.totalorder %s26, 0
      %p193 = por %p191, %p192
      %s194 = ssub.s32 %s27, %s39
      %s195 = ssub.s32 %s28, %s35
      %s196 = sor.u32 %s194, %s195
      %p197 = scmp.eq.s32.totalorder %s196, 0
      %s199 = sadd.s32 %s198, 1
      %s200 = scalar_select %p197, %s198, %s199
      %p203 = pneg %p197
      %p204 = scmp.eq.s32.totalorder %s20, 1
      %p205 = por %p203, %p204
      %p206 = scmp.ne.s32.totalorder %s198, %s201
      %p207 = scmp.eq.s32.totalorder %s20, 0
      %p208 = por %p206, %p207
      %p209 = scmp.ne.s32.totalorder %s198, %s201
      %p210 = scmp.eq.s32.totalorder %s25, 1
      %p211 = por %p209, %p210
      %p212 = scmp.ne.s32.totalorder %s201, %s202
      %p213 = scmp.eq.s32.totalorder %s25, 0
      %p214 = por %p212, %p213
      %p215 = scmp.ne.s32.totalorder %s201, %s202
      %p216 = scmp.eq.s32.totalorder %s26, 1
      %p217 = por %p215, %p216
      %p219 = scmp.ne.s32.totalorder %s202, %s218
      %p220 = scmp.eq.s32.totalorder %s26, 0
      %p221 = por %p219, %p220
      %s222 = ssub.s32 %s27, %s39
      %s223 = ssub.s32 %s28, %s35
      %s224 = sor.u32 %s222, %s223
      %p225 = scmp.eq.s32.totalorder %s224, 0
      %s227 = sadd.s32 %s226, 1
      %s228 = scalar_select %p225, %s226, %s227
      %p231 = pneg %p225
      %p232 = scmp.eq.s32.totalorder %s20, 1
      %p233 = por %p231, %p232
      %p234 = scmp.ne.s32.totalorder %s226, %s229
      %p235 = scmp.eq.s32.totalorder %s20, 0
      %p236 = por %p234, %p235
      %p237 = scmp.ne.s32.totalorder %s226, %s229
      %p238 = scmp.eq.s32.totalorder %s25, 1
      %p239 = por %p237, %p238
      %p240 = scmp.ne.s32.totalorder %s229, %s230
      %p241 = scmp.eq.s32.totalorder %s25, 0
      %p242 = por %p240, %p241
      %p243 = scmp.ne.s32.totalorder %s229, %s230
      %p244 = scmp.eq.s32.totalorder %s26, 1
      %p245 = por %p243, %p244
      %p247 = scmp.ne.s32.totalorder %s230, %s246
      %p248 = scmp.eq.s32.totalorder %s26, 0
      %p249 = por %p247, %p248
      %p250 = scmp.le.s32.totalorder 1, %s20
      %p251 = scmp.lt.s32.totalorder %s20, 3
      %p252 = pnand %p250, %p251
      %p253 = pneg %p252
      // Predicated region
      $region9: #{tpu_custom_call.1} parent=5 // pred_check
        _
      $region10: #{tpu_custom_call.1} parent=5 // pred_check_branch
        %255 = sbr.rel (%p252) target = $region12
      $region11: #{tpu_custom_call.1} parent=5 // pred_region
        %s256 = ssub.s32 %s20, 1
        // Predicated region
        $region13: #{tpu_custom_call.1} parent=11 // pred_check
          %p257 = pneg %p81
        $region14: #{tpu_custom_call.1} parent=11 // pred_check_branch
          %259 = sbr.rel (%p257) target = $region16
        $region15: #{tpu_custom_call.1} parent=11 // pred_region
          _
        $region16: #{tpu_custom_call.1} parent=11 // pred_fallthru
          _
        // Predicated region
        $region17: #{tpu_custom_call.1} parent=11 // pred_check
          %p260 = pneg %p102
        $region18: #{tpu_custom_call.1} parent=11 // pred_check_branch
          %262 = sbr.rel (%p260) target = $region20
        $region19: #{tpu_custom_call.1} parent=11 // pred_region
          _
        $region20: #{tpu_custom_call.1} parent=11 // pred_fallthru
          _
        // Predicated region
        $region21: #{tpu_custom_call.1} parent=11 // pred_check
          %p263 = pneg %p123
        $region22: #{tpu_custom_call.1} parent=11 // pred_check_branch
          %265 = sbr.rel (%p263) target = $region24
        $region23: #{tpu_custom_call.1} parent=11 // pred_region
          _
        $region24: #{tpu_custom_call.1} parent=11 // pred_fallthru
          _
        // Predicated region
        $region25: #{tpu_custom_call.1} parent=11 // pred_check
          %p266 = pneg %p144
        $region26: #{tpu_custom_call.1} parent=11 // pred_check_branch
          %268 = sbr.rel (%p266) target = $region28
        $region27: #{tpu_custom_call.1} parent=11 // pred_region
          _
        $region28: #{tpu_custom_call.1} parent=11 // pred_fallthru
          _
        // Predicated region
        $region29: #{tpu_custom_call.1} parent=11 // pred_check
          %p269 = pneg %p165
        $region30: #{tpu_custom_call.1} parent=11 // pred_check_branch
          %271 = sbr.rel (%p269) target = $region32
        $region31: #{tpu_custom_call.1} parent=11 // pred_region
          _
        $region32: #{tpu_custom_call.1} parent=11 // pred_fallthru
          _
        // Predicated region
        $region33: #{tpu_custom_call.1} parent=11 // pred_check
          %p272 = pneg %p186
        $region34: #{tpu_custom_call.1} parent=11 // pred_check_branch
          %274 = sbr.rel (%p272) target = $region36
        $region35: #{tpu_custom_call.1} parent=11 // pred_region
          _
        $region36: #{tpu_custom_call.1} parent=11 // pred_fallthru
          _
      $region12: #{tpu_custom_call.1} parent=5 // pred_fallthru
        _
      %p275 = scmp.lt.s32.totalorder %s20, 2
      // Predicated region
      $region37: #{tpu_custom_call.1} parent=5 // pred_check
        %p276 = pneg %p275
      $region38: #{tpu_custom_call.1} parent=5 // pred_check_branch
        %278 = sbr.rel (%p276) target = $region40
      $region39: #{tpu_custom_call.1} parent=5 // pred_region
        // Predicated region
        $region41: #{tpu_custom_call.1} parent=39 // pred_check
          %p279 = pneg %p54
        $region42: #{tpu_custom_call.1} parent=39 // pred_check_branch
          %281 = sbr.rel (%p279) target = $region44
        $region43: #{tpu_custom_call.1} parent=39 // pred_region
          %p282 = scmp.lt.s32.totalorder %s27, 1
          %s283 = scalar_select %p282, %s27, 1
          %p284 = scmp.lt.s32.totalorder %s28, 0
          %s285 = scalar_select %p284, %s28, 0
          %s286 = sadd.s32 %s285, %s283
          %s287 = smul.addr %s286, 4
          %s288 = scalar_lea.vmem %s0, %s287
        $region44: #{tpu_custom_call.1} parent=39 // pred_fallthru
          _
        // Predicated region
        $region45: #{tpu_custom_call.1} parent=39 // pred_check
          %p289 = pneg %p208
        $region46: #{tpu_custom_call.1} parent=39 // pred_check_branch
          %291 = sbr.rel (%p289) target = $region48
        $region47: #{tpu_custom_call.1} parent=39 // pred_region
          %s292 = sand.u32 %s198, 1
          %s293 = scalar_lea.sflag [#allocation3], %s292
          %s294 = sand.u32 %s198, 1
          %s295 = smul.addr %s294, 4
          %s296 = scalar_lea.vmem [#allocation2], %s295
          %298 = vsyncadd %s293, 0
          %s299 = sadd.s32 %s28, %s27
          %s300 = smul.addr %s299, 4
          %s301 = scalar_lea.hbm %s7, %s300
          %s303 = sshll.u32 %s301, 4
          %s304 = int_to_ptr.hbm [resolvable:$true] %s303
          %s305 = sshll.u32 %s296, 4
          %s306 = int_to_ptr.vmem [resolvable:$true] %s305
          %308 = dma.hbm_to_vmem [thread:$0]  %s304, 64, %s306, %s293
        $region48: #{tpu_custom_call.1} parent=39 // pred_fallthru
          _
      $region40: #{tpu_custom_call.1} parent=5 // pred_fallthru
        _
      %p309 = scmp.le.s32.totalorder 1, %s20
      %p310 = scmp.lt.s32.totalorder %s20, 3
      %p311 = pnand %p309, %p310
      %p312 = pneg %p311
      // Predicated region
      $region49: #{tpu_custom_call.1} parent=5 // pred_check
        _
      $region50: #{tpu_custom_call.1} parent=5 // pred_check_branch
        %314 = sbr.rel (%p311) target = $region52
      $region51: #{tpu_custom_call.1} parent=5 // pred_region
        %s315 = ssub.s32 %s20, 1
        %s316 = sand.u32 %s201, 1
        %s317 = scalar_lea.sflag [#allocation3], %s316
        %s318 = sand.u32 %s201, 1
        %s319 = smul.addr %s318, 4
        %s320 = scalar_lea.vmem [#allocation2], %s319
        // Predicated region
        $region53: #{tpu_custom_call.1} parent=51 // pred_check
          %p321 = pneg %p214
        $region54: #{tpu_custom_call.1} parent=51 // pred_check_branch
          %323 = sbr.rel (%p321) target = $region56
        $region55: #{tpu_custom_call.1} parent=51 // pred_region
          %325 = dma.done %s317, 64
        $region56: #{tpu_custom_call.1} parent=51 // pred_fallthru
          _
        %p326 = scmp.lt.s32.totalorder %s29, 1
        %s327 = scalar_select %p326, %s29, 1
        %p328 = scmp.lt.s32.totalorder %s30, 0
        %s329 = scalar_select %p328, %s30, 0
        %s330 = sadd.s32 %s329, %s327
        %s331 = smul.addr %s330, 4
        %s332 = scalar_lea.vmem %s0, %s331
        %p333 = pneg %p60
        %p334 = pneg %p57
        %p335 = pneg %p81
        %p336 = pneg %p78
        %p337 = pneg %p102
        %p338 = pneg %p99
        %p339 = pneg %p123
        %p340 = pneg %p120
        %p341 = pneg %p144
        %p342 = pneg %p141
        %p343 = pneg %p165
        %p344 = pneg %p162
        %p345 = pneg %p186
        %p346 = pneg %p183
        %s347 = sand.u32 %s201, 1
        %s348 = scalar_lea.sflag [#allocation3], %s347
        %s349 = sand.u32 %s201, 1
        %s350 = smul.addr %s349, 4
        %s351 = scalar_lea.vmem [#allocation2], %s350
        %p352 = pneg %p214
        %p353 = pneg %p211
        %p354 = pneg %p242
        %p355 = pneg %p239
        %s356 = sand.u32 %s229, 1
        %s357 = scalar_lea.sflag [#allocation4], %s356
        %s358 = sand.u32 %s229, 1
        %s359 = smul.addr %s358, 4
        %s360 = scalar_lea.vmem [#allocation5], %s359
        %p361 = scmp.lt.s32.totalorder %s29, 1
        %s362 = scalar_select %p361, %s29, 1
        %p363 = scmp.lt.s32.totalorder %s30, 0
        %s364 = scalar_select %p363, %s30, 0
        %s365 = sadd.s32 %s364, %s362
        %s366 = smul.addr %s365, 4
        %s367 = scalar_lea.vmem %s0, %s366
        %v368 = vld [vmem:[%s367] sm:$0xf]
        %v369 = vld [vmem:[%s1] sm:$0xff]
        %v370 = vld [vmem:[%s1 + $0x8] sm:$0xff]
        %v371 = vld [vmem:[%s2] sm:$0x1]
        %v373 = vperm.slane %v371, 0
        %vm375 = vcmask 130048
        %v377 = vsel %vm375, %v368, 0
        %379 = vmatpush.msra.mxu0 0.0
        %380 = vmatpush.msra.mxu0 0.0
        %381 = vmatpush.msra.mxu0 0.0
        %382 = vmatpush.msra.mxu0 0.0
        %383 = vmatpush.msra.mxu0 0.0
        %384 = vmatpush.msra.mxu0 0.0
        %385 = vmatpush.msra.mxu0 0.0
        %386 = vmatpush.msra.mxu0 0.0
        %387 = vmatpush.msra.mxu0 0.0
        %388 = vmatpush.msra.mxu0 0.0
        %389 = vmatpush.msra.mxu0 0.0
        %390 = vmatpush.msra.mxu0 0.0
        %391 = vmatpush.msra.mxu0 0.0
        %392 = vmatpush.msra.mxu0 0.0
        %393 = vmatpush.msra.mxu0 %v370
        %394 = vmatpush.msra.mxu0 %v369
        %395 = vmatmul.f32.gmra.mxu0 %v377
        %v396 = vpop.f32.mrf.mxu0
        %v397 = vadd.f32 %v373, %v396
        %398 = vdwg.mxu0
        %v399 = vld [vmem:[%s5] sm:$0xff]
        %v400 = vld [vmem:[%s5 + $0x8] sm:$0xff]
        %v401 = vld [vmem:[%s5 + $0x10] sm:$0xff]
        %v402 = vld [vmem:[%s5 + $0x18] sm:$0xff]
        %v403 = vld [vmem:[%s5 + $0x20] sm:$0xff]
        %v404 = vld [vmem:[%s5 + $0x28] sm:$0xff]
        %v405 = vld [vmem:[%s5 + $0x30] sm:$0xff]
        %v406 = vld [vmem:[%s5 + $0x38] sm:$0xff]
        %v407 = vld [vmem:[%s5 + $0x40] sm:$0xff]
        %v408 = vld [vmem:[%s5 + $0x48] sm:$0xff]
        %v409 = vld [vmem:[%s5 + $0x50] sm:$0xff]
        %v410 = vld [vmem:[%s5 + $0x58] sm:$0xff]
        %v411 = vld [vmem:[%s5 + $0x60] sm:$0xff]
        %v412 = vld [vmem:[%s5 + $0x68] sm:$0xff]
        %v413 = vld [vmem:[%s5 + $0x70] sm:$0xff]
        %v414 = vld [vmem:[%s5 + $0x78] sm:$0xff]
        %415 = vmatpush.msra.mxu0 %v414
        %416 = vmatpush.msra.mxu0 %v413
        %417 = vmatpush.msra.mxu0 %v412
        %418 = vmatpush.msra.mxu0 %v411
        %419 = vmatpush.msra.mxu0 %v410
        %420 = vmatpush.msra.mxu0 %v409
        %421 = vmatpush.msra.mxu0 %v408
        %422 = vmatpush.msra.mxu0 %v407
        %423 = vmatpush.msra.mxu0 %v406
        %424 = vmatpush.msra.mxu0 %v405
        %425 = vmatpush.msra.mxu0 %v404
        %426 = vmatpush.msra.mxu0 %v403
        %427 = vmatpush.msra.mxu0 %v402
        %428 = vmatpush.msra.mxu0 %v401
        %429 = vmatpush.msra.mxu0 %v400
        %430 = vmatpush.msra.mxu0 %v399
        %431 = vmatmul.f32.gmra.mxu0 %v397
        %v432 = vpop.f32.mrf.mxu0
        %v433 = vadd.f32 0.0, %v432
        %434 = vdwg.mxu0
        %v435 = vld [vmem:[%s6] sm:$0xff]
        %vm436 = vcmask 64512
        %v438 = vsel %vm436, %v433, 0
        %440 = vmatpush.msra.mxu0 0.0
        %441 = vmatpush.msra.mxu0 0.0
        %442 = vmatpush.msra.mxu0 0.0
        %443 = vmatpush.msra.mxu0 0.0
        %444 = vmatpush.msra.mxu0 0.0
        %445 = vmatpush.msra.mxu0 0.0
        %446 = vmatpush.msra.mxu0 0.0
        %447 = vmatpush.msra.mxu0 0.0
        %448 = vmatpush.msra.mxu0 0.0
        %449 = vmatpush.msra.mxu0 0.0
        %450 = vmatpush.msra.mxu0 0.0
        %451 = vmatpush.msra.mxu0 0.0
        %452 = vmatpush.msra.mxu0 0.0
        %453 = vmatpush.msra.mxu0 0.0
        %454 = vmatpush.msra.mxu0 0.0
        %455 = vmatpush.msra.mxu0 %v435
        %456 = vmatmul.f32.gmra.mxu0 %v438
        %v457 = vpop.f32.mrf.mxu0
        %v458 = vadd.f32 0.0, %v457
        %459 = vdwg.mxu0
        %v460 = vsub.f32 %v397, %v458
        %v461 = vmul.f32 %v460, %v460
        %462 = vmatpush.msra.mxu0 %v414
        %463 = vmatpush.msra.mxu0 %v413
        %464 = vmatpush.msra.mxu0 %v412
        %465 = vmatpush.msra.mxu0 %v411
        %466 = vmatpush.msra.mxu0 %v410
        %467 = vmatpush.msra.mxu0 %v409
        %468 = vmatpush.msra.mxu0 %v408
        %469 = vmatpush.msra.mxu0 %v407
        %470 = vmatpush.msra.mxu0 %v406
        %471 = vmatpush.msra.mxu0 %v405
        %472 = vmatpush.msra.mxu0 %v404
        %473 = vmatpush.msra.mxu0 %v403
        %474 = vmatpush.msra.mxu0 %v402
        %475 = vmatpush.msra.mxu0 %v401
        %476 = vmatpush.msra.mxu0 %v400
        %477 = vmatpush.msra.mxu0 %v399
        %478 = vmatmul.f32.gmra.mxu0 %v461
        %v479 = vpop.f32.mrf.mxu0
        %v480 = vadd.f32 0.0, %v479
        %481 = vdwg.mxu0
        %v483 = vsel %vm436, %v480, 0
        %485 = vmatpush.msra.mxu0 0.0
        %486 = vmatpush.msra.mxu0 0.0
        %487 = vmatpush.msra.mxu0 0.0
        %488 = vmatpush.msra.mxu0 0.0
        %489 = vmatpush.msra.mxu0 0.0
        %490 = vmatpush.msra.mxu0 0.0
        %491 = vmatpush.msra.mxu0 0.0
        %492 = vmatpush.msra.mxu0 0.0
        %493 = vmatpush.msra.mxu0 0.0
        %494 = vmatpush.msra.mxu0 0.0
        %495 = vmatpush.msra.mxu0 0.0
        %496 = vmatpush.msra.mxu0 0.0
        %497 = vmatpush.msra.mxu0 0.0
        %498 = vmatpush.msra.mxu0 0.0
        %499 = vmatpush.msra.mxu0 0.0
        %500 = vmatpush.msra.mxu0 %v435
        %501 = vmatmul.f32.gmra.mxu0 %v483
        %v502 = vpop.f32.mrf.mxu0
        %v503 = vadd.f32 1e-06, %v502
        %504 = vdwg.mxu0
        %v505 = vrsqrt.pop %v503
        %v506 = vmul.f32 %v505, %v503
        %v507 = vmul.f32 %v506, %v505
        %v508 = vmul.f32 0.5, %v507
        %v509 = vsub.f32 1.5, %v508
        %v510 = vmul.f32 %v505, %v509
        %vm511 = vweird.f32 %v503
        %vm512 = vweird.f32 %v505
        %vm513 = vmor %vm511, %vm512
        %v514 = vsel %vm513, %v505, %v510
        %v515 = vmul.f32 %v460, %v514
        %v516 = vld [vmem:[%s3] sm:$0x1]
        %v518 = vperm.slane %v516, 0
        %v520 = vmul.f32 %v515, %v518
        %v521 = vld [vmem:[%s4] sm:$0x1]
        %v523 = vperm.slane %v521, 0
        %v525 = vadd.f32 %v520, %v523
        %v526 = vmul.f32 %v525, 0.5
        %v527 = vmul.f32 %v525, 0.70710677
        %v528 = vmul.f32 %v527, %v527
        %v529 = vmin.f32 16.0, %v528
        %v530 = vmul.f32 %v529, 2.1237322e-06
        %v531 = vadd.f32 %v530, 0.00028619796
        %v532 = vmul.f32 %v529, %v531
        %v533 = vadd.f32 %v532, 0.0036580483
        %v534 = vmul.f32 %v529, %v533
        %v535 = vadd.f32 %v534, 0.05243302
        %v536 = vmul.f32 %v529, %v535
        %v537 = vadd.f32 %v536, 0.18741608
        %v538 = vmul.f32 %v529, %v537
        %v539 = vadd.f32 %v538, 1.1283791
        %v540 = vmul.f32 %v527, %v539
        %v541 = vmul.f32 %v529, 3.8918573e-05
        %v542 = vadd.f32 %v541, 0.001143296
        %v543 = vmul.f32 %v529, %v542
        %v544 = vadd.f32 %v543, 0.014752088
        %v545 = vmul.f32 %v529, %v544
        %v546 = vadd.f32 %v545, 0.112945676
        %v547 = vmul.f32 %v529, %v546
        %v548 = vadd.f32 %v547, 0.4994258
        %v549 = vmul.f32 %v529, %v548
        %v550 = vadd.f32 %v549, 1.0
        %v551 = vrcp.pop %v550
        %v552 = vmul.f32 %v550, %v551
        %v553 = vsub.f32 1.0, %v552
        %v554 = vmul.f32 %v551, %v553
        %v555 = vadd.f32 %v551, %v554
        %vm556 = vweird.f32 %v550
        %vm557 = vweird.f32 %v551
        %vm558 = vmor %vm556, %vm557
        %v559 = vsel %vm558, %v551, %v555
        %v560 = vand.u32 2147483647, %v550
        %vm561 = vcmp.eq.f32.partialorder %v560, 8.507059e+37
        %v562 = vand.u32 %v550, 2147483648
        %v563 = vor.u32 1.1754944e-38, %v562
        %v564 = vsel %vm561, %v563, %v559
        %v565 = vmul.f32 %v540, %v564
        %v566 = vmin.f32 %v565, 1.0
        %v567 = vmax.f32 %v566, -1.0
        %v568 = vadd.f32 %v567, 1.0
        %v569 = vmul.f32 %v526, %v568
        %v570 = vld [vmem:[%s320] sm:$0xf]
        %v571 = vadd.f32 %v570, %v569
        %572 = vst [vmem:[%s360] sm:$0xf] %v571
        %s573 = sand.u32 %s229, 1
        %s574 = scalar_lea.sflag [#allocation4], %s573
        %s575 = sand.u32 %s229, 1
        %s576 = smul.addr %s575, 4
        %s577 = scalar_lea.vmem [#allocation5], %s576
        // Predicated region
        $region57: #{tpu_custom_call.1} parent=51 // pred_check
          %p578 = pneg %p239
        $region58: #{tpu_custom_call.1} parent=51 // pred_check_branch
          %580 = sbr.rel (%p578) target = $region60
        $region59: #{tpu_custom_call.1} parent=51 // pred_region
          %582 = vsyncadd %s574, 0
          %s583 = sadd.s32 %s30, %s29
          %s584 = smul.addr %s583, 4
          %s585 = scalar_lea.hbm %s8, %s584
          %s587 = sshll.u32 %s577, 4
          %s588 = int_to_ptr.vmem [resolvable:$true] %s587
          %s589 = sshll.u32 %s585, 4
          %s590 = int_to_ptr.hbm [resolvable:$true] %s589
          %592 = dma.vmem_to_hbm [thread:$0]  %s588, 64, %s590, %s574
        $region60: #{tpu_custom_call.1} parent=51 // pred_fallthru
          _
      $region52: #{tpu_custom_call.1} parent=5 // pred_fallthru
        _
      %p593 = scmp.le.s32.totalorder 2, %s20
      // Predicated region
      $region61: #{tpu_custom_call.1} parent=5 // pred_check
        %p594 = pneg %p593
      $region62: #{tpu_custom_call.1} parent=5 // pred_check_branch
        %596 = sbr.rel (%p594) target = $region64
      $region63: #{tpu_custom_call.1} parent=5 // pred_region
        %s597 = ssub.s32 %s20, 2
        // Predicated region
        $region65: #{tpu_custom_call.1} parent=63 // pred_check
          %p598 = pneg %p245
        $region66: #{tpu_custom_call.1} parent=63 // pred_check_branch
          %600 = sbr.rel (%p598) target = $region68
        $region67: #{tpu_custom_call.1} parent=63 // pred_region
          %s601 = sand.u32 %s230, 1
          %s602 = scalar_lea.sflag [#allocation4], %s601
          %s603 = sand.u32 %s230, 1
          %s604 = smul.addr %s603, 4
          %s605 = scalar_lea.vmem [#allocation5], %s604
          %607 = dma.done %s602, 64
        $region68: #{tpu_custom_call.1} parent=63 // pred_fallthru
          _
      $region64: #{tpu_custom_call.1} parent=5 // pred_fallthru
        _
    $region6: #{tpu_custom_call.1} parent=1 // loop_footer
      %s24 = sadd.s32 1, %s20
    $region7: #{tpu_custom_call.1} parent=1 // loop_footer_branch
      %19 = sbr.rel target = $region3
    $region8: #{tpu_custom_call.1} parent=1 // loop_exit
      _
    %608 = vsyncpa [#allocation3], 1
    %s609 = scalar_lea.sflag [#allocation3], 1
    %610 = vsyncpa %s609, 1
    %611 = vsyncpa [#allocation4], 1
    %s612 = scalar_lea.sflag [#allocation4], 1
    %613 = vsyncpa %s612, 1

</llo_original>
